<compile_context>
chip_gen: v7x
topology: tpu7x:2x2x1
jax: 0.10.0
libtpu: 0.0.40
codegen_flags: <defaults>
</compile_context>

<pallas_src>
import functools

import jax
import jax.numpy as jnp
from jax import lax
from jax.experimental import pallas as pl
from jax.experimental.pallas import tpu as pltpu


def _vmem_limit_bytes():
    """Generation-aware VMEM budget with headroom; safe fallback off-TPU."""
    try:
        cap = pltpu.get_tpu_info().vmem_capacity_bytes
    except Exception:
        cap = 128 * 1024 * 1024
    return int(min(cap * 0.75, 100 * 1024 * 1024))


def _layernorm(x, w, b, eps=1e-5):
    # matches whisper LayerNorm: compute in float32, cast back to x.dtype
    xf = x.astype(jnp.float32)
    mu = jnp.mean(xf, axis=-1, keepdims=True)
    var = jnp.mean((xf - mu) ** 2, axis=-1, keepdims=True)
    y = (xf - mu) * lax.rsqrt(var + eps)
    return (y * w + b).astype(x.dtype)


# --------------------------------------------------------------------------
# Kernel 1: LayerNorm + fused QKV projection, chunked over the 3C output dim.
#           Output is a lane-dense (B, T, 3C) slab (full-width stores).
#           grid = (B, T//tr, 3C//qc); last axis sequential (LN reuse).
# --------------------------------------------------------------------------
def _ln_qkv_kernel(x_ref, lnw_ref, lnb_ref, w_ref, b_ref, o_ref, h_s):
    c = pl.program_id(2)

    @pl.when(c == 0)
    def _():
        h_s[...] = _layernorm(x_ref[0], lnw_ref[...], lnb_ref[...]).astype(h_s.dtype)

    h = h_s[...]
    y = jnp.dot(h, w_ref[...], preferred_element_type=jnp.float32) + b_ref[...]
    o_ref[0] = y.astype(o_ref.dtype)


# --------------------------------------------------------------------------
# Kernel 2: flash attention (online softmax over K/V tiles, heads unrolled
#           inside the kernel) + output projection + residual + bias.
#           grid = (B, T//tq, T//tk); last axis is the reduction.
# --------------------------------------------------------------------------
def _flash_attn_kernel(x_ref, q_ref, k_ref, v_ref, wo_ref, bo_ref, o_ref,
                       m_s, l_s, ctx_s, *, n_head, t_valid, t_pad):
    j = pl.program_id(2)
    nk = pl.num_programs(2)

    tq = x_ref.shape[1]
    C = x_ref.shape[2]
    hd = C // n_head

    @pl.when(j == 0)
    def _():
        m_s[...] = jnp.full(m_s.shape, -jnp.inf, jnp.float32)
        l_s[...] = jnp.zeros(l_s.shape, jnp.float32)
        ctx_s[...] = jnp.zeros(ctx_s.shape, jnp.float32)

    q = q_ref[0]                      # (tq, C)  attention scale folded into Wq
    k = k_ref[0]                      # (tk, C)
    v = v_ref[0]                      # (tk, C)
    tk = k.shape[0]

    if t_pad != t_valid:
        col = j * tk + lax.broadcasted_iota(jnp.int32, (tq, tk), 1)
        kv_mask = col < t_valid
    else:
        kv_mask = None

    for h in range(n_head):           # static unroll: heads live in one step
        sl = slice(h * hd, (h + 1) * hd)
        q_h = q[:, sl]
        k_h = k[:, sl]
        v_h = v[:, sl]

        # scores in f32; contract the head dim directly (no explicit k.T)
        s = lax.dot_general(q_h, k_h, (((1,), (1,)), ((), ())),
                            preferred_element_type=jnp.float32)   # (tq, tk)
        if kv_mask is not None:
            s = jnp.where(kv_mask, s, -1e30)

        m_prev = m_s[h]
        m_new = jnp.maximum(m_prev, s.max(axis=-1, keepdims=True))
        alpha = jnp.exp(m_prev - m_new)
        p = jnp.exp(s - m_new)
        l_s[h] = alpha * l_s[h] + p.sum(axis=-1, keepdims=True)
        ctx_s[:, sl] = alpha * ctx_s[:, sl] + jnp.dot(
            p.astype(v_h.dtype), v_h, preferred_element_type=jnp.float32)
        m_s[h] = m_new

    @pl.when(j == nk - 1)
    def _():
        # exact per-head normalization, single (tq,C)@(C,C) output projection,
        # residual + bias, one store -> no duplicated f32 output accumulator.
        parts = []
        for h in range(n_head):
            sl = slice(h * hd, (h + 1) * hd)
            inv = 1.0 / l_s[h]                 # exact (approx recip broke tol)
            parts.append(ctx_s[:, sl] * inv)
        ctx = jnp.concatenate(parts, axis=-1)
        out = (x_ref[0].astype(jnp.float32) + bo_ref[...]
               + jnp.dot(ctx.astype(wo_ref.dtype), wo_ref[...],
                         preferred_element_type=jnp.float32))
        o_ref[0] = out.astype(o_ref.dtype)


# --------------------------------------------------------------------------
# Kernel 3: LayerNorm + MLP chunked over the 4C hidden dim + residual.
#           grid = (B, T//tr, n_mlp//mc); last axis is a reduction.
# --------------------------------------------------------------------------
def _mlp_kernel(x_ref, lnw_ref, lnb_ref, w1_ref, b1_ref, w2_ref, b2_ref,
                o_ref, h_s, acc_s):
    c = pl.program_id(2)
    nc = pl.num_programs(2)

    @pl.when(c == 0)
    def _():
        x = x_ref[0]
        h_s[...] = _layernorm(x, lnw_ref[...], lnb_ref[...]).astype(h_s.dtype)
        acc_s[...] = x.astype(jnp.float32) + b2_ref[...]

    h = h_s[...]
    t = jnp.dot(h, w1_ref[...], preferred_element_type=jnp.float32) + b1_ref[...]
    # Exact (erf) GELU to match nn.GELU() default.
    t = jax.nn.gelu(t, approximate=False)
    acc_s[...] += jnp.dot(t.astype(h.dtype), w2_ref[...],
                          preferred_element_type=jnp.float32)

    @pl.when(c == nc - 1)
    def _():
        o_ref[0] = acc_s[...].astype(o_ref.dtype)


# --------------------------------------------------------------------------
# Tiling helpers
# --------------------------------------------------------------------------
def _round_up(n, m):
    return ((n + m - 1) // m) * m


def _pick_seq_mult(n_blocks, base, pref):
    """Largest multiple of `base` that divides n_blocks*base and is <= pref."""
    best = 1
    for m in range(1, n_blocks + 1):
        if n_blocks % m == 0 and m * base <= pref:
            best = m
    return best * base


def _pick_chunk(total, pref):
    """Largest multiple of 128 dividing `total` and <= pref; else full dim."""
    if total <= pref:
        return total
    best = None
    c = 128
    while c <= pref and c < total:
        if total % c == 0:
            best = c
        c += 128
    return best if best is not None else total


# --------------------------------------------------------------------------
# Weight prep (once, outside the hot path): transpose, fuse QKV, fold the
# attention scale (hd**-0.5 total) into Wq/bq, cast matmul operands to
# compute_dtype (bf16 recommended on TPU; f32 used in the test below).
# --------------------------------------------------------------------------
def prepare_params(params, n_head, compute_dtype=jnp.float32):
    C = params["wq"].shape[0]
    hd = C // n_head
    scale = jnp.asarray(hd ** -0.5, jnp.float32)   # == hd**-0.25 on q and on k
    cd = compute_dtype
    wqkv = jnp.concatenate(
        [params["wq"].T * scale, params["wk"].T, params["wv"].T], axis=1)
    bqkv = jnp.concatenate(
        [params["bq"] * scale, jnp.zeros_like(params["bq"]), params["bv"]])
    return {
        "ln1_w": params["ln1_w"].reshape(1, C).astype(jnp.float32),
        "ln1_b": params["ln1_b"].reshape(1, C).astype(jnp.float32),
        "wqkv": wqkv.astype(cd),                       # (C, 3C)
        "bqkv": bqkv.reshape(1, 3 * C).astype(jnp.float32),
        "wo_t": params["wo"].T.astype(cd),             # (C, C)
        "bo": params["bo"].reshape(1, C).astype(jnp.float32),
        "ln2_w": params["ln2_w"].reshape(1, C).astype(jnp.float32),
        "ln2_b": params["ln2_b"].reshape(1, C).astype(jnp.float32),
        "w1_t": params["w1"].T.astype(cd),             # (C, 4C)
        "b1": params["b1"].reshape(1, -1).astype(jnp.float32),
        "w2_t": params["w2"].T.astype(cd),             # (4C, C)
        "b2": params["b2"].reshape(1, C).astype(jnp.float32),
    }


# --------------------------------------------------------------------------
# Wrapper
# --------------------------------------------------------------------------
def residual_attention_block(x, prep, n_head, *,
                             attn_q_tile=128, attn_kv_tile=512,
                             row_tile=256, qkv_chunk=768, mlp_chunk=1024):
    B, T, C = x.shape
    cd = prep["wqkv"].dtype
    n_mlp = prep["w1_t"].shape[1]

    # ---- sequence tiling with padding for non-divisible T (e.g. 1500/448) ---
    tq = _round_up(min(attn_q_tile, _round_up(T, 8)), 8)
    T_pad = _round_up(T, tq)
    n_blk = T_pad // tq
    tk = _pick_seq_mult(n_blk, tq, max(attn_kv_tile, tq))   # K/V tile >= tq
    tr = _pick_seq_mult(n_blk, tq, max(row_tile, tq))       # QKV/MLP row tile
    qc = _pick_chunk(3 * C, qkv_chunk)
    mc = _pick_chunk(n_mlp, mlp_chunk)

    x_p = jnp.pad(x, ((0, 0), (0, T_pad - T), (0, 0))) if T_pad != T else x

    vmem = _vmem_limit_bytes()

    def cparams(sem):
        return pltpu.CompilerParams(dimension_semantics=sem,
                                    vmem_limit_bytes=vmem)

    # ---- 1) LayerNorm + fused QKV projection (lane-dense (B,T,3C) slab) ----
    qkv = pl.pallas_call(
        _ln_qkv_kernel,
        out_shape=jax.ShapeDtypeStruct((B, T_pad, 3 * C), cd),
        grid=(B, T_pad // tr, (3 * C) // qc),
        in_specs=[
            pl.BlockSpec((1, tr, C), lambda b, i, c: (b, i, 0)),
            pl.BlockSpec((1, C), lambda b, i, c: (0, 0)),
            pl.BlockSpec((1, C), lambda b, i, c: (0, 0)),
            pl.BlockSpec((C, qc), lambda b, i, c: (0, c)),     # W_qkv chunk
            pl.BlockSpec((1, qc), lambda b, i, c: (0, c)),     # b_qkv chunk
        ],
        out_specs=pl.BlockSpec((1, tr, qc), lambda b, i, c: (b, i, c)),
        scratch_shapes=[pltpu.VMEM((tr, C), cd)],              # ln1(x) reuse
        compiler_params=cparams(("parallel", "parallel", "arbitrary")),
    )(x_p, prep["ln1_w"], prep["ln1_b"], prep["wqkv"], prep["bqkv"])

    # ---- 2) Flash attention (heads inside) + out-proj + residual -----------
    flash = functools.partial(_flash_attn_kernel, n_head=n_head,
                              t_valid=T, t_pad=T_pad)
    x_mid = pl.pallas_call(
        flash,
        out_shape=jax.ShapeDtypeStruct((B, T_pad, C), x.dtype),
        grid=(B, T_pad // tq, T_pad // tk),
        in_specs=[
            pl.BlockSpec((1, tq, C), lambda b, i, j: (b, i, 0)),   # x residual
            pl.BlockSpec((1, tq, C), lambda b, i, j: (b, i, 0)),   # q slab
            pl.BlockSpec((1, tk, C), lambda b, i, j: (b, j, 1)),   # k slab
            pl.BlockSpec((1, tk, C), lambda b, i, j: (b, j, 2)),   # v slab
            pl.BlockSpec((C, C), lambda b, i, j: (0, 0)),          # Wo resident
            pl.BlockSpec((1, C), lambda b, i, j: (0, 0)),          # bo
        ],
        out_specs=pl.BlockSpec((1, tq, C), lambda b, i, j: (b, i, 0)),
        scratch_shapes=[
            pltpu.VMEM((n_head, tq, 1), jnp.float32),   # m per head
            pltpu.VMEM((n_head, tq, 1), jnp.float32),   # l per head
            pltpu.VMEM((tq, C), jnp.float32),           # head-concat ctx acc
        ],
        compiler_params=cparams(("parallel", "parallel", "arbitrary")),
    )(x_p, qkv, qkv, qkv, prep["wo_t"], prep["bo"])

    # ---- 3) LayerNorm + MLP (hidden dim chunked) + residual -----------------
    out = pl.pallas_call(
        _mlp_kernel,
        out_shape=jax.ShapeDtypeStruct((B, T_pad, C), x.dtype),
        grid=(B, T_pad // tr, n_mlp // mc),
        in_specs=[
            pl.BlockSpec((1, tr, C), lambda b, i, c: (b, i, 0)),
            pl.BlockSpec((1, C), lambda b, i, c: (0, 0)),
            pl.BlockSpec((1, C), lambda b, i, c: (0, 0)),
            pl.BlockSpec((C, mc), lambda b, i, c: (0, c)),     # W1 chunk
            pl.BlockSpec((1, mc), lambda b, i, c: (0, c)),     # b1 chunk
            pl.BlockSpec((mc, C), lambda b, i, c: (c, 0)),     # W2 chunk
            pl.BlockSpec((1, C), lambda b, i, c: (0, 0)),
        ],
        out_specs=pl.BlockSpec((1, tr, C), lambda b, i, c: (b, i, 0)),
        scratch_shapes=[
            pltpu.VMEM((tr, C), cd),             # ln2(x) reused across chunks
            pltpu.VMEM((tr, C), jnp.float32),    # residual + MLP accumulator
        ],
        compiler_params=cparams(("parallel", "parallel", "arbitrary")),
    )(x_mid, prep["ln2_w"], prep["ln2_b"],
      prep["w1_t"], prep["b1"], prep["w2_t"], prep["b2"])

    return out[:, :T, :] if T_pad != T else out


# --------------------------------------------------------------------------
# Pure-JAX replica of the PyTorch forward (for validation).
# --------------------------------------------------------------------------
def reference(x, p, n_head):
    B, T, C = x.shape
    hd = C // n_head
    scale = hd ** -0.25

    def ln(z, w, b):
        zf = z.astype(jnp.float32)
        mu = zf.mean(-1, keepdims=True)
        var = ((zf - mu) ** 2).mean(-1, keepdims=True)
        return ((zf - mu) / jnp.sqrt(var + 1e-5) * w + b).astype(z.dtype)

    h = ln(x, p["ln1_w"], p["ln1_b"])
    q = h @ p["wq"].T + p["bq"]
    k = h @ p["wk"].T
    v = h @ p["wv"].T + p["bv"]
    q = q.reshape(B, T, n_head, hd).transpose(0, 2, 1, 3) * scale
    k = k.reshape(B, T, n_head, hd).transpose(0, 2, 3, 1) * scale
    v = v.reshape(B, T, n_head, hd).transpose(0, 2, 1, 3)
    qk = (q @ k).astype(jnp.float32)
    w = jax.nn.softmax(qk, axis=-1).astype(x.dtype)
    wv = (w @ v).transpose(0, 2, 1, 3).reshape(B, T, C)
    x = x + (wv @ p["wo"].T + p["bo"])
    h2 = ln(x, p["ln2_w"], p["ln2_b"])
    h2 = jax.nn.gelu(h2 @ p["w1"].T + p["b1"], approximate=False)
    x = x + (h2 @ p["w2"].T + p["b2"])
    return x


if __name__ == "__main__":
    # Small shapes consistent with the module: batch=2, n_ctx=14 (deliberately
    # not a multiple of 8 to exercise padding + K-column masking), n_state=128,
    # n_head=4 (head_dim=32), n_mlp=512.  Tiles chosen so the test exercises
    # multiple q tiles, multiple K/V reduction tiles, multiple QKV-projection
    # chunks and multiple MLP hidden-dim chunks.
    B, T, C, H = 2, 14, 128, 4
    n_mlp = 4 * C

    key = jax.random.PRNGKey(0)
    ks = jax.random.split(key, 16)
    f32 = jnp.float32

    params = {
        "ln1_w": 1.0 + 0.1 * jax.random.normal(ks[0], (C,), f32),
        "ln1_b": 0.1 * jax.random.normal(ks[1], (C,), f32),
        "wq": 0.1 * jax.random.normal(ks[2], (C, C), f32),
        "bq": 0.1 * jax.random.normal(ks[3], (C,), f32),
        "wk": 0.1 * jax.random.normal(ks[4], (C, C), f32),
        "wv": 0.1 * jax.random.normal(ks[5], (C, C), f32),
        "bv": 0.1 * jax.random.normal(ks[6], (C,), f32),
        "wo": 0.1 * jax.random.normal(ks[7], (C, C), f32),
        "bo": 0.1 * jax.random.normal(ks[8], (C,), f32),
        "ln2_w": 1.0 + 0.1 * jax.random.normal(ks[9], (C,), f32),
        "ln2_b": 0.1 * jax.random.normal(ks[10], (C,), f32),
        "w1": 0.1 * jax.random.normal(ks[11], (n_mlp, C), f32),
        "b1": 0.1 * jax.random.normal(ks[12], (n_mlp,), f32),
        "w2": 0.1 * jax.random.normal(ks[13], (C, n_mlp), f32),
        "b2": 0.1 * jax.random.normal(ks[14], (C,), f32),
    }
    x = jax.random.normal(ks[15], (B, T, C), f32)

    prep = prepare_params(params, n_head=H, compute_dtype=jnp.float32)  # once
    out = residual_attention_block(
        x, prep, n_head=H,
        attn_q_tile=8, attn_kv_tile=8, row_tile=8,
        qkv_chunk=128, mlp_chunk=128)
    out = jax.block_until_ready(out)

    ref = jax.block_until_ready(reference(x, params, n_head=H))
    err = float(jnp.max(jnp.abs(out - ref)))
    assert out.shape == (B, T, C) and out.dtype == x.dtype
    # exact reciprocal + f32 accumulation -> only flash reordering error left
    assert jnp.allclose(out, ref, atol=2e-3, rtol=2e-3), err

    print("KERNEL_OK")
</pallas_src>

<mosaic_0001>
module attributes {stable_mosaic.version = 11 : i64} {
  func.func @_ln_qkv_kernel(%arg0: i32, %arg1: i32, %arg2: i32, %arg3: memref<1x8x128xf32, #tpu.memory_space<vmem>>, %arg4: memref<1x128xf32, #tpu.memory_space<vmem>>, %arg5: memref<1x128xf32, #tpu.memory_space<vmem>>, %arg6: memref<128x128xf32, #tpu.memory_space<vmem>>, %arg7: memref<1x128xf32, #tpu.memory_space<vmem>>, %arg8: memref<1x8x128xf32, #tpu.memory_space<vmem>>, %arg9: memref<8x128xf32, #tpu.memory_space<vmem>>) attributes {dimension_semantics = [#tpu.dimension_semantics<parallel>, #tpu.dimension_semantics<parallel>, #tpu.dimension_semantics<arbitrary>], iteration_bounds = array<i64: 2, 2, 3>, scalar_prefetch = 0 : i64, scratch_operands = 1 : i64, tpu.core_type = #tpu.core_type<tc>, window_params = [{transform_indices = @transform_0, window_bounds = array<i64: 1, 8, 128>}, {pipeline_mode = #tpu.pipeline_mode<synchronous>, transform_indices = @transform_1, window_bounds = array<i64: 1, 128>}, {pipeline_mode = #tpu.pipeline_mode<synchronous>, transform_indices = @transform_2, window_bounds = array<i64: 1, 128>}, {transform_indices = @transform_3, window_bounds = array<i64: 128, 128>}, {transform_indices = @transform_4, window_bounds = array<i64: 1, 128>}, {transform_indices = @transform_5, window_bounds = array<i64: 1, 8, 128>}]} {
    %c0_i32 = arith.constant 0 : i32
    %0 = arith.cmpi eq, %arg2, %c0_i32 : i32
    %1 = arith.extui %0 : i1 to i32
    %c0_i32_0 = arith.constant 0 : i32
    %2 = arith.cmpi ne, %1, %c0_i32_0 : i32
    scf.if %2 {
      %c0_9 = arith.constant 0 : index
      %c0_10 = arith.constant 0 : index
      %c0_11 = arith.constant 0 : index
      %12 = vector.load %arg3[%c0_9, %c0_10, %c0_11] : memref<1x8x128xf32, #tpu.memory_space<vmem>>, vector<1x8x128xf32>
      %13 = vector.shape_cast %12 : vector<1x8x128xf32> to vector<8x128xf32>
      %c0_12 = arith.constant 0 : index
      %c0_13 = arith.constant 0 : index
      %14 = vector.load %arg4[%c0_12, %c0_13] : memref<1x128xf32, #tpu.memory_space<vmem>>, vector<1x128xf32>
      %c0_14 = arith.constant 0 : index
      %c0_15 = arith.constant 0 : index
      %15 = vector.load %arg5[%c0_14, %c0_15] : memref<1x128xf32, #tpu.memory_space<vmem>>, vector<1x128xf32>
      %cst_16 = arith.constant dense<0.000000e+00> : vector<8xf32>
      %16 = vector.multi_reduction <add>, %13, %cst_16 [1] : vector<8x128xf32> to vector<8xf32>
      %17 = vector.shape_cast %16 : vector<8xf32> to vector<8x1xf32>
      %cst_17 = arith.constant 1.280000e+02 : f32
      %18 = vector.broadcast %cst_17 : f32 to vector<8x1xf32>
      %19 = arith.divf %17, %18 : vector<8x1xf32>
      %20 = vector.broadcast %19 : vector<8x1xf32> to vector<8x128xf32>
      %21 = arith.subf %13, %20 : vector<8x128xf32>
      %22 = arith.mulf %21, %21 : vector<8x128xf32>
      %cst_18 = arith.constant dense<0.000000e+00> : vector<8xf32>
      %23 = vector.multi_reduction <add>, %22, %cst_18 [1] : vector<8x128xf32> to vector<8xf32>
      %24 = vector.shape_cast %23 : vector<8xf32> to vector<8x1xf32>
      %cst_19 = arith.constant 1.280000e+02 : f32
      %25 = vector.broadcast %cst_19 : f32 to vector<8x1xf32>
      %26 = arith.divf %24, %25 : vector<8x1xf32>
      %27 = vector.broadcast %19 : vector<8x1xf32> to vector<8x128xf32>
      %28 = arith.subf %13, %27 : vector<8x128xf32>
      %cst_20 = arith.constant 9.99999974E-6 : f32
      %29 = vector.broadcast %cst_20 : f32 to vector<8x1xf32>
      %30 = arith.addf %26, %29 : vector<8x1xf32>
      %31 = math.rsqrt %30 : vector<8x1xf32>
      %32 = vector.broadcast %31 : vector<8x1xf32> to vector<8x128xf32>
      %33 = arith.mulf %28, %32 : vector<8x128xf32>
      %34 = vector.broadcast %14 : vector<1x128xf32> to vector<8x128xf32>
      %35 = arith.mulf %33, %34 : vector<8x128xf32>
      %36 = vector.broadcast %15 : vector<1x128xf32> to vector<8x128xf32>
      %37 = arith.addf %35, %36 : vector<8x128xf32>
      %c0_21 = arith.constant 0 : index
      %c0_22 = arith.constant 0 : index
      %38 = vector.load %arg9[%c0_21, %c0_22] : memref<8x128xf32, #tpu.memory_space<vmem>>, vector<8x128xf32>
      tpu.vector_store %arg9[%c0_21, %c0_22], %37 {strides = array<i32>} : memref<8x128xf32, #tpu.memory_space<vmem>>, vector<8x128xf32>,
    } else {
    }
    %c0 = arith.constant 0 : index
    %c0_1 = arith.constant 0 : index
    %3 = vector.load %arg9[%c0, %c0_1] : memref<8x128xf32, #tpu.memory_space<vmem>>, vector<8x128xf32>
    %c0_2 = arith.constant 0 : index
    %c0_3 = arith.constant 0 : index
    %4 = vector.load %arg6[%c0_2, %c0_3] : memref<128x128xf32, #tpu.memory_space<vmem>>, vector<128x128xf32>
    %cst = arith.constant dense<0.000000e+00> : vector<8x128xf32>
    %5 = tpu.matmul %3, %4, %cst {dimension_numbers = #tpu.dot_dimension_numbers<[1], [0], [0], [1], [0, 0, 1, 1], [], []>} : vector<8x128xf32>, vector<128x128xf32>, vector<8x128xf32> -> vector<8x128xf32>
    %c0_4 = arith.constant 0 : index
    %c0_5 = arith.constant 0 : index
    %6 = vector.load %arg7[%c0_4, %c0_5] : memref<1x128xf32, #tpu.memory_space<vmem>>, vector<1x128xf32>
    %7 = vector.broadcast %6 : vector<1x128xf32> to vector<8x128xf32>
    %8 = arith.addf %5, %7 : vector<8x128xf32>
    %c0_6 = arith.constant 0 : index
    %c0_7 = arith.constant 0 : index
    %c0_8 = arith.constant 0 : index
    %9 = vector.load %arg8[%c0_6, %c0_7, %c0_8] : memref<1x8x128xf32, #tpu.memory_space<vmem>>, vector<1x8x128xf32>
    %10 = vector.shape_cast %9 : vector<1x8x128xf32> to vector<8x128xf32>
    %11 = vector.shape_cast %8 : vector<8x128xf32> to vector<1x8x128xf32>
    tpu.vector_store %arg8[%c0_6, %c0_7, %c0_8], %11 {strides = array<i32>} : memref<1x8x128xf32, #tpu.memory_space<vmem>>, vector<1x8x128xf32>,
    return
  }
  func.func @transform_0(%arg0: i32, %arg1: i32, %arg2: i32) -> (i32, i32, i32) {
    %c0_i32 = arith.constant 0 : i32
    %c0_i32_0 = arith.constant 0 : i32
    return %arg0, %arg1, %c0_i32 : i32, i32, i32
  }
  func.func @transform_1(%arg0: i32, %arg1: i32, %arg2: i32) -> (i32, i32) {
    %c0_i32 = arith.constant 0 : i32
    %c0_i32_0 = arith.constant 0 : i32
    %c0_i32_1 = arith.constant 0 : i32
    return %c0_i32, %c0_i32_0 : i32, i32
  }
  func.func @transform_2(%arg0: i32, %arg1: i32, %arg2: i32) -> (i32, i32) {
    %c0_i32 = arith.constant 0 : i32
    %c0_i32_0 = arith.constant 0 : i32
    %c0_i32_1 = arith.constant 0 : i32
    return %c0_i32, %c0_i32_0 : i32, i32
  }
  func.func @transform_3(%arg0: i32, %arg1: i32, %arg2: i32) -> (i32, i32) {
    %c0_i32 = arith.constant 0 : i32
    %c0_i32_0 = arith.constant 0 : i32
    return %c0_i32, %arg2 : i32, i32
  }
  func.func @transform_4(%arg0: i32, %arg1: i32, %arg2: i32) -> (i32, i32) {
    %c0_i32 = arith.constant 0 : i32
    %c0_i32_0 = arith.constant 0 : i32
    return %c0_i32, %arg2 : i32, i32
  }
  func.func @transform_5(%arg0: i32, %arg1: i32, %arg2: i32) -> (i32, i32, i32) {
    %c0_i32 = arith.constant 0 : i32
    return %arg0, %arg1, %arg2 : i32, i32, i32
  }
}

</mosaic_0001>

<llo_original>
// kernel: tpu_custom_call.1
$region0: #{tpu_custom_call.1}
  #allocation0 [shape = 'u32[]', space=smem, size = 0x4, offset = 0x4, fixed_abs, tag = 'smem constant byte address 0x4 - core index']
  #allocation1 [shape = 'u32[144,128]{1,0:T(1,128)}', space=vmem, size = 0x12000, scoped, tag = 'internal scratch']
  #allocation2 [shape = 'f32[8,128]{1,0:T(8,128)}', space=vmem, size = 0x1000, scoped, tag = 'scratch operand']
  %s0 = inlined_call_operand.hbm [shape: f32[2,16,128], index: 0, kind: input, shape index: {}]
  %s1 = inlined_call_operand.hbm [shape: f32[1,128], index: 1, kind: input, shape index: {}]
  %s2 = inlined_call_operand.hbm [shape: f32[1,128], index: 2, kind: input, shape index: {}]
  %s3 = inlined_call_operand.hbm [shape: f32[128,384], index: 3, kind: input, shape index: {}]
  %s4 = inlined_call_operand.hbm [shape: f32[1,384], index: 4, kind: input, shape index: {}]
  %s5 = inlined_call_operand.hbm [shape: f32[2,16,384], index: 5, kind: output, shape index: {}]
  %s6 = sld [smem:[#allocation0]]
  $region77: #{tpu_custom_call.1} parent=0
    _
  %s8 = ssub.s32 1, %s6
  %s9 = scalar_select 0, %s8, %s6
  $region1: #{tpu_custom_call.1} parent=0
    #allocation3 [shape = 'u8[8192]{0}', space=vmem, size = 0x2000, scoped, tag = 'input window, operand 0']
    #allocation4 [shape = 's32[2]{0}', space=sflag, size = 0x8, scoped, tag = 'scoped memory for tpu_custom_call.1']
    #allocation5 [shape = 's32[2]{0}', space=sflag, size = 0x8, scoped, tag = 'scoped memory for tpu_custom_call.1']
    #allocation6 [shape = 'u8[512]{0}', space=vmem, size = 0x400, scoped, tag = 'input window, operand 1, single buffered']
    #allocation7 [shape = 's32[1]{0}', space=sflag, size = 0x4, scoped, tag = 'scoped memory for tpu_custom_call.1']
    #allocation8 [shape = 'u8[512]{0}', space=vmem, size = 0x400, scoped, tag = 'input window, operand 2, single buffered']
    #allocation9 [shape = 'u8[131072]{0}', space=vmem, size = 0x20000, scoped, tag = 'input window, operand 3']
    #allocation10 [shape = 's32[2]{0}', space=sflag, size = 0x8, scoped, tag = 'scoped memory for tpu_custom_call.1']
    #allocation11 [shape = 'u8[1024]{0}', space=vmem, size = 0x400, scoped, tag = 'input window, operand 4']
    #allocation12 [shape = 'u8[8192]{0}', space=vmem, size = 0x2000, scoped, tag = 'output window, operand 0']
    %10 = vsyncpa [#allocation4], 0
    %s11 = scalar_lea.sflag [#allocation4], 1
    %12 = vsyncpa %s11, 0
    %13 = vsyncpa [#allocation7], 0
    %14 = vsyncpa [#allocation10], 0
    %s15 = scalar_lea.sflag [#allocation10], 1
    %16 = vsyncpa %s15, 0
    %17 = vsyncpa [#allocation5], 0
    %s18 = scalar_lea.sflag [#allocation5], 1
    %19 = vsyncpa %s18, 0
    loop: start=0, step=1, limit=14
    $region2: #{tpu_custom_call.1} parent=1 // loop_pre_header
      _
    $region3: #{tpu_custom_call.1} parent=1 // loop_header
      %s21 = sphi 0, %s25
      %p22 = scmp.ge.s32.totalorder %s21, 14
      %s28 = sphi 0, %s47
      %s29 = sphi 0, %s43
      %s30 = sphi 0, %s39
      %s31 = sphi 0, %s28
      %s32 = sphi 0, %s29
      %s33 = sphi 0, %s30
      %s34 = sphi 0, %s31
      %s35 = sphi 0, %s32
      %s36 = sphi 0, %s33
      %s52 = sphi 0, %s54
      %s55 = sphi 0, %s52
      %s56 = sphi 0, %s55
      %s72 = sphi 0, %s56
      %s76 = sphi 0, %s76
      %s78 = sphi 0, %s76
      %s79 = sphi 0, %s78
      %s93 = sphi 0, %s79
      %s97 = sphi 0, %s97
      %s99 = sphi 0, %s97
      %s100 = sphi 0, %s99
      %s114 = sphi 0, %s100
      %s120 = sphi 0, %s122
      %s123 = sphi 0, %s120
      %s124 = sphi 0, %s123
      %s140 = sphi 0, %s124
      %s146 = sphi 0, %s148
      %s149 = sphi 0, %s146
      %s150 = sphi 0, %s149
      %s166 = sphi 0, %s150
      %s176 = sphi 0, %s178
      %s179 = sphi 0, %s176
      %s180 = sphi 0, %s179
      %s196 = sphi 0, %s180
    $region4: #{tpu_custom_call.1} parent=1 // loop_header_branch
      %24 = sbr.rel (%p22) target = $region8
    $region5: #{tpu_custom_call.1} parent=1 // loop_body
      %s26 = ssub.s32 %s21, 1
      %s27 = ssub.s32 %s21, 2
      %s37 = sadd.s32 1, %s30
      %p38 = scmp.ge.s32.totalorder %s37, 3
      %s39 = scalar_select %p38, 0, %s37
      %s40 = sadd.s32 1, %s29
      %s41 = scalar_select %p38, %s40, %s29
      %p42 = scmp.ge.s32.totalorder %s41, 2
      %s43 = scalar_select %p42, 0, %s41
      %s44 = sadd.s32 1, %s28
      %s45 = scalar_select %p42, %s44, %s28
      %p46 = scmp.ge.s32.totalorder %s45, 2
      %s47 = scalar_select %p46, 0, %s45
      %s48 = ssub.s32 %s28, %s47
      %s49 = ssub.s32 %s29, %s43
      %s50 = sor.u32 %s48, %s49
      %p51 = scmp.eq.s32.totalorder %s50, 0
      %s53 = sadd.s32 %s52, 1
      %s54 = scalar_select %p51, %s52, %s53
      %p57 = pneg %p51
      %p58 = scmp.eq.s32.totalorder %s21, 11
      %p59 = por %p57, %p58
      %p60 = scmp.ne.s32.totalorder %s52, %s55
      %p61 = scmp.eq.s32.totalorder %s21, 0
      %p62 = por %p60, %p61
      %p63 = scmp.ne.s32.totalorder %s52, %s55
      %p64 = scmp.eq.s32.totalorder %s26, 11
      %p65 = por %p63, %p64
      %p66 = scmp.ne.s32.totalorder %s55, %s56
      %p67 = scmp.eq.s32.totalorder %s26, 0
      %p68 = por %p66, %p67
      %p69 = scmp.ne.s32.totalorder %s55, %s56
      %p70 = scmp.eq.s32.totalorder %s27, 11
      %p71 = por %p69, %p70
      %p73 = scmp.ne.s32.totalorder %s56, %s72
      %p74 = scmp.eq.s32.totalorder %s27, 0
      %p75 = por %p73, %p74
      %s77 = sadd.s32 %s76, 1
      %p80 = scmp.eq.s32.totalorder %s21, 11
      %p81 = scmp.ne.s32.totalorder %s76, %s78
      %p82 = scmp.eq.s32.totalorder %s21, 0
      %p83 = por %p81, %p82
      %p84 = scmp.ne.s32.totalorder %s76, %s78
      %p85 = scmp.eq.s32.totalorder %s26, 11
      %p86 = por %p84, %p85
      %p87 = scmp.ne.s32.totalorder %s78, %s79
      %p88 = scmp.eq.s32.totalorder %s26, 0
      %p89 = por %p87, %p88
      %p90 = scmp.ne.s32.totalorder %s78, %s79
      %p91 = scmp.eq.s32.totalorder %s27, 11
      %p92 = por %p90, %p91
      %p94 = scmp.ne.s32.totalorder %s79, %s93
      %p95 = scmp.eq.s32.totalorder %s27, 0
      %p96 = por %p94, %p95
      %s98 = sadd.s32 %s97, 1
      %p101 = scmp.eq.s32.totalorder %s21, 11
      %p102 = scmp.ne.s32.totalorder %s97, %s99
      %p103 = scmp.eq.s32.totalorder %s21, 0
      %p104 = por %p102, %p103
      %p105 = scmp.ne.s32.totalorder %s97, %s99
      %p106 = scmp.eq.s32.totalorder %s26, 11
      %p107 = por %p105, %p106
      %p108 = scmp.ne.s32.totalorder %s99, %s100
      %p109 = scmp.eq.s32.totalorder %s26, 0
      %p110 = por %p108, %p109
      %p111 = scmp.ne.s32.totalorder %s99, %s100
      %p112 = scmp.eq.s32.totalorder %s27, 11
      %p113 = por %p111, %p112
      %p115 = scmp.ne.s32.totalorder %s100, %s114
      %p116 = scmp.eq.s32.totalorder %s27, 0
      %p117 = por %p115, %p116
      %s118 = ssub.s32 %s30, %s39
      %p119 = scmp.eq.s32.totalorder %s118, 0
      %s121 = sadd.s32 %s120, 1
      %s122 = scalar_select %p119, %s120, %s121
      %p125 = pneg %p119
      %p126 = scmp.eq.s32.totalorder %s21, 11
      %p127 = por %p125, %p126
      %p128 = scmp.ne.s32.totalorder %s120, %s123
      %p129 = scmp.eq.s32.totalorder %s21, 0
      %p130 = por %p128, %p129
      %p131 = scmp.ne.s32.totalorder %s120, %s123
      %p132 = scmp.eq.s32.totalorder %s26, 11
      %p133 = por %p131, %p132
      %p134 = scmp.ne.s32.totalorder %s123, %s124
      %p135 = scmp.eq.s32.totalorder %s26, 0
      %p136 = por %p134, %p135
      %p137 = scmp.ne.s32.totalorder %s123, %s124
      %p138 = scmp.eq.s32.totalorder %s27, 11
      %p139 = por %p137, %p138
      %p141 = scmp.ne.s32.totalorder %s124, %s140
      %p142 = scmp.eq.s32.totalorder %s27, 0
      %p143 = por %p141, %p142
      %s144 = ssub.s32 %s30, %s39
      %p145 = scmp.eq.s32.totalorder %s144, 0
      %s147 = sadd.s32 %s146, 1
      %s148 = scalar_select %p145, %s146, %s147
      %p151 = pneg %p145
      %p152 = scmp.eq.s32.totalorder %s21, 11
      %p153 = por %p151, %p152
      %p154 = scmp.ne.s32.totalorder %s146, %s149
      %p155 = scmp.eq.s32.totalorder %s21, 0
      %p156 = por %p154, %p155
      %p157 = scmp.ne.s32.totalorder %s146, %s149
      %p158 = scmp.eq.s32.totalorder %s26, 11
      %p159 = por %p157, %p158
      %p160 = scmp.ne.s32.totalorder %s149, %s150
      %p161 = scmp.eq.s32.totalorder %s26, 0
      %p162 = por %p160, %p161
      %p163 = scmp.ne.s32.totalorder %s149, %s150
      %p164 = scmp.eq.s32.totalorder %s27, 11
      %p165 = por %p163, %p164
      %p167 = scmp.ne.s32.totalorder %s150, %s166
      %p168 = scmp.eq.s32.totalorder %s27, 0
      %p169 = por %p167, %p168
      %s170 = ssub.s32 %s28, %s47
      %s171 = ssub.s32 %s29, %s43
      %s172 = sor.u32 %s170, %s171
      %s173 = ssub.s32 %s30, %s39
      %s174 = sor.u32 %s172, %s173
      %p175 = scmp.eq.s32.totalorder %s174, 0
      %s177 = sadd.s32 %s176, 1
      %s178 = scalar_select %p175, %s176, %s177
      %p181 = pneg %p175
      %p182 = scmp.eq.s32.totalorder %s21, 11
      %p183 = por %p181, %p182
      %p184 = scmp.ne.s32.totalorder %s176, %s179
      %p185 = scmp.eq.s32.totalorder %s21, 0
      %p186 = por %p184, %p185
      %p187 = scmp.ne.s32.totalorder %s176, %s179
      %p188 = scmp.eq.s32.totalorder %s26, 11
      %p189 = por %p187, %p188
      %p190 = scmp.ne.s32.totalorder %s179, %s180
      %p191 = scmp.eq.s32.totalorder %s26, 0
      %p192 = por %p190, %p191
      %p193 = scmp.ne.s32.totalorder %s179, %s180
      %p194 = scmp.eq.s32.totalorder %s27, 11
      %p195 = por %p193, %p194
      %p197 = scmp.ne.s32.totalorder %s180, %s196
      %p198 = scmp.eq.s32.totalorder %s27, 0
      %p199 = por %p197, %p198
      %p200 = scmp.le.s32.totalorder 1, %s21
      %p201 = scmp.lt.s32.totalorder %s21, 13
      %p202 = pnand %p200, %p201
      %p203 = pneg %p202
      // Predicated region
      $region9: #{tpu_custom_call.1} parent=5 // pred_check
        _
      $region10: #{tpu_custom_call.1} parent=5 // pred_check_branch
        %205 = sbr.rel (%p202) target = $region12
      $region11: #{tpu_custom_call.1} parent=5 // pred_region
        %s206 = ssub.s32 %s21, 1
        // Predicated region
        $region13: #{tpu_custom_call.1} parent=11 // pred_check
          %p207 = pneg %p89
        $region14: #{tpu_custom_call.1} parent=11 // pred_check_branch
          %209 = sbr.rel (%p207) target = $region16
        $region15: #{tpu_custom_call.1} parent=11 // pred_region
          %s211 = ssub.s32 16, 16
          %212 = vsyncadd [#allocation7], %s211
          %s214 = sshll.u32 [#allocation6], 4
          %s215 = int_to_ptr.vmem [resolvable:$true] %s214
          %217 = dma.hbm_to_vmem [thread:$0]  %s1, 16, %s215, [#allocation7]
        $region16: #{tpu_custom_call.1} parent=11 // pred_fallthru
          _
        // Predicated region
        $region17: #{tpu_custom_call.1} parent=11 // pred_check
          %p218 = pneg %p110
        $region18: #{tpu_custom_call.1} parent=11 // pred_check_branch
          %220 = sbr.rel (%p218) target = $region20
        $region19: #{tpu_custom_call.1} parent=11 // pred_region
          %s222 = ssub.s32 16, 16
          %223 = vsyncadd [#allocation7], %s222
          %s225 = sshll.u32 [#allocation8], 4
          %s226 = int_to_ptr.vmem [resolvable:$true] %s225
          %228 = dma.hbm_to_vmem [thread:$0]  %s2, 16, %s226, [#allocation7]
        $region20: #{tpu_custom_call.1} parent=11 // pred_fallthru
          _
      $region12: #{tpu_custom_call.1} parent=5 // pred_fallthru
        _
      %p229 = scmp.lt.s32.totalorder %s21, 12
      // Predicated region
      $region21: #{tpu_custom_call.1} parent=5 // pred_check
        %p230 = pneg %p229
      $region22: #{tpu_custom_call.1} parent=5 // pred_check_branch
        %232 = sbr.rel (%p230) target = $region24
      $region23: #{tpu_custom_call.1} parent=5 // pred_region
        // Predicated region
        $region25: #{tpu_custom_call.1} parent=23 // pred_check
          %p233 = pneg %p62
        $region26: #{tpu_custom_call.1} parent=23 // pred_check_branch
          %235 = sbr.rel (%p233) target = $region28
        $region27: #{tpu_custom_call.1} parent=23 // pred_region
          %s236 = sand.u32 %s52, 1
          %s237 = scalar_lea.sflag [#allocation4], %s236
          %s238 = sand.u32 %s52, 1
          %s239 = smul.addr %s238, 8
          %s240 = scalar_lea.vmem [#allocation3], %s239
          %s242 = ssub.s32 128, 128
          %243 = vsyncadd %s237, %s242
          %s244 = smul.addr %s28, 2
          %s245 = sadd.s32 %s29, %s244
          %s246 = smul.addr %s245, 128
          %s247 = scalar_lea.hbm %s0, %s246
          %s249 = sshll.u32 %s240, 4
          %s250 = int_to_ptr.vmem [resolvable:$true] %s249
          %252 = dma.hbm_to_vmem [thread:$0]  %s247, 128, %s250, %s237
        $region28: #{tpu_custom_call.1} parent=23 // pred_fallthru
          _
        // Predicated region
        $region29: #{tpu_custom_call.1} parent=23 // pred_check
          %p253 = pneg %p130
        $region30: #{tpu_custom_call.1} parent=23 // pred_check_branch
          %255 = sbr.rel (%p253) target = $region32
        $region31: #{tpu_custom_call.1} parent=23 // pred_region
          %s256 = sand.u32 %s21, 1
          %s257 = scalar_lea.sflag [#allocation10], %s256
          %s258 = sand.u32 %s120, 1
          %s259 = smul.addr %s258, 128
          %s260 = scalar_lea.vmem [#allocation9], %s259
          %s262 = ssub.s32 2048, 2048
          %263 = vsyncadd %s257, %s262
          %s264 = smul.addr %s30, 128
          %s265 = scalar_lea.hbm %s3, %s264
          %s266 = sshll.u32 %s260, 4
          %s267 = int_to_ptr.vmem [resolvable:$true] %s266
          %272 = dma.hbm_to_vmem [thread:$0]  %s265, 2048, %s267, %s257, 384, 128, 8
        $region32: #{tpu_custom_call.1} parent=23 // pred_fallthru
          _
        // Predicated region
        $region33: #{tpu_custom_call.1} parent=23 // pred_check
          %p273 = pneg %p156
        $region34: #{tpu_custom_call.1} parent=23 // pred_check_branch
          %275 = sbr.rel (%p273) target = $region36
        $region35: #{tpu_custom_call.1} parent=23 // pred_region
          %s276 = sand.u32 %s21, 1
          %s277 = scalar_lea.sflag [#allocation10], %s276
          %s278 = sand.u32 %s146, 1
          %s279 = scalar_lea.vmem [#allocation11], %s278
          %s281 = ssub.s32 16, 16
          %282 = vsyncadd %s277, %s281
          %s283 = smul.addr %s30, 16
          %s284 = scalar_lea.hbm %s4, %s283
          %s286 = sshll.u32 %s279, 4
          %s287 = int_to_ptr.vmem [resolvable:$true] %s286
          %289 = dma.hbm_to_vmem [thread:$0]  %s284, 16, %s287, %s277
        $region36: #{tpu_custom_call.1} parent=23 // pred_fallthru
          _
      $region24: #{tpu_custom_call.1} parent=5 // pred_fallthru
        _
      %p290 = scmp.le.s32.totalorder 1, %s21
      %p291 = scmp.lt.s32.totalorder %s21, 13
      %p292 = pnand %p290, %p291
      %p293 = pneg %p292
      // Predicated region
      $region37: #{tpu_custom_call.1} parent=5 // pred_check
        _
      $region38: #{tpu_custom_call.1} parent=5 // pred_check_branch
        %295 = sbr.rel (%p292) target = $region40
      $region39: #{tpu_custom_call.1} parent=5 // pred_region
        %s296 = ssub.s32 %s21, 1
        %s297 = sand.u32 %s55, 1
        %s298 = scalar_lea.sflag [#allocation4], %s297
        %s299 = sand.u32 %s55, 1
        %s300 = smul.addr %s299, 8
        %s301 = scalar_lea.vmem [#allocation3], %s300
        // Predicated region
        $region41: #{tpu_custom_call.1} parent=39 // pred_check
          %p302 = pneg %p68
        $region42: #{tpu_custom_call.1} parent=39 // pred_check_branch
          %304 = sbr.rel (%p302) target = $region44
        $region43: #{tpu_custom_call.1} parent=39 // pred_region
          %305 = dma.done %s298, 128
        $region44: #{tpu_custom_call.1} parent=39 // pred_fallthru
          _
        // Predicated region
        $region45: #{tpu_custom_call.1} parent=39 // pred_check
          %p306 = pneg %p89
        $region46: #{tpu_custom_call.1} parent=39 // pred_check_branch
          %308 = sbr.rel (%p306) target = $region48
        $region47: #{tpu_custom_call.1} parent=39 // pred_region
          %309 = dma.done [#allocation7], 16
        $region48: #{tpu_custom_call.1} parent=39 // pred_fallthru
          _
        // Predicated region
        $region49: #{tpu_custom_call.1} parent=39 // pred_check
          %p310 = pneg %p110
        $region50: #{tpu_custom_call.1} parent=39 // pred_check_branch
          %312 = sbr.rel (%p310) target = $region52
        $region51: #{tpu_custom_call.1} parent=39 // pred_region
          %313 = dma.done [#allocation7], 16
        $region52: #{tpu_custom_call.1} parent=39 // pred_fallthru
          _
        %s314 = sand.u32 %s26, 1
        %s315 = scalar_lea.sflag [#allocation10], %s314
        %s316 = sand.u32 %s123, 1
        %s317 = smul.addr %s316, 128
        %s318 = scalar_lea.vmem [#allocation9], %s317
        // Predicated region
        $region53: #{tpu_custom_call.1} parent=39 // pred_check
          %p319 = pneg %p136
        $region54: #{tpu_custom_call.1} parent=39 // pred_check_branch
          %321 = sbr.rel (%p319) target = $region56
        $region55: #{tpu_custom_call.1} parent=39 // pred_region
          %322 = dma.done %s315, 2048
        $region56: #{tpu_custom_call.1} parent=39 // pred_fallthru
          _
        %s323 = sand.u32 %s26, 1
        %s324 = scalar_lea.sflag [#allocation10], %s323
        %s325 = sand.u32 %s149, 1
        %s326 = scalar_lea.vmem [#allocation11], %s325
        // Predicated region
        $region57: #{tpu_custom_call.1} parent=39 // pred_check
          %p327 = pneg %p162
        $region58: #{tpu_custom_call.1} parent=39 // pred_check_branch
          %329 = sbr.rel (%p327) target = $region60
        $region59: #{tpu_custom_call.1} parent=39 // pred_region
          %330 = dma.done %s324, 16
        $region60: #{tpu_custom_call.1} parent=39 // pred_fallthru
          _
        %s331 = sand.u32 %s55, 1
        %s332 = scalar_lea.sflag [#allocation4], %s331
        %s333 = sand.u32 %s55, 1
        %s334 = smul.addr %s333, 8
        %s335 = scalar_lea.vmem [#allocation3], %s334
        %p336 = pneg %p68
        %p337 = pneg %p65
        %p338 = pneg %p89
        %p339 = pneg %p86
        %p340 = pneg %p110
        %p341 = pneg %p107
        %s342 = sand.u32 %s26, 1
        %s343 = scalar_lea.sflag [#allocation10], %s342
        %s344 = sand.u32 %s123, 1
        %s345 = smul.addr %s344, 128
        %s346 = scalar_lea.vmem [#allocation9], %s345
        %p347 = pneg %p136
        %p348 = pneg %p133
        %s349 = sand.u32 %s26, 1
        %s350 = scalar_lea.sflag [#allocation10], %s349
        %s351 = sand.u32 %s149, 1
        %s352 = scalar_lea.vmem [#allocation11], %s351
        %p353 = pneg %p162
        %p354 = pneg %p159
        %p355 = pneg %p192
        %p356 = pneg %p189
        %s357 = sand.u32 %s179, 1
        %s358 = scalar_lea.sflag [#allocation5], %s357
        %s359 = sand.u32 %s179, 1
        %s360 = smul.addr %s359, 8
        %s361 = scalar_lea.vmem [#allocation12], %s360
        %p362 = scmp.eq.s32.totalorder %s33, 0
        // Predicated region
        $region61: #{tpu_custom_call.1} parent=39 // pred_check
          %p363 = pneg %p362
        $region62: #{tpu_custom_call.1} parent=39 // pred_check_branch
          %365 = sbr.rel (%p363) target = $region64
        $region63: #{tpu_custom_call.1} parent=39 // pred_region
          %v366 = vld [vmem:[%s301] sm:$0xff]
          %v367 = vld [vmem:[#allocation6] sm:$0x1]
          %v368 = vld [vmem:[#allocation8] sm:$0x1]
          %369 = vadd.xlane.f32.xlu0 %v366
          %v370 = vpop.xlane.xlu0 %369
          %v371 = vrcp.pop 128.0
          %v372 = vmul.f32 %v370, %v371
          %v373 = vsub.f32 %v366, %v372
          %v374 = vmul.f32 %v373, %v373
          %375 = vadd.xlane.f32.xlu0 %v374
          %v376 = vpop.xlane.xlu0 %375
          %v377 = vmul.f32 %v376, %v371
          %v378 = vadd.f32 %v377, 1e-05
          %v379 = vrsqrt.pop %v378
          %v380 = vmul.f32 %v373, %v379
          %v382 = vlaneseq
          %v383 = vshrl.u32 %v382, 7
          %v384 = vsub.s32 0, %v383
          %v385 = vrot.slane %v367, %v384
          %v387 = vmul.f32 %v380, %v385
          %v389 = vlaneseq
          %v390 = vshrl.u32 %v389, 7
          %v391 = vsub.s32 0, %v390
          %v392 = vrot.slane %v368, %v391
          %v394 = vadd.f32 %v387, %v392
          %395 = vst [vmem:[#allocation2] sm:$0xff] %v394
        $region64: #{tpu_custom_call.1} parent=39 // pred_fallthru
          _
        %v396 = vld [vmem:[#allocation2] sm:$0xff]
        %v397 = vld [vmem:[%s318] sm:$0xff]
        %v398 = vld [vmem:[%s318 + $0x8] sm:$0xff]
        %v399 = vld [vmem:[%s318 + $0x10] sm:$0xff]
        %v400 = vld [vmem:[%s318 + $0x18] sm:$0xff]
        %v401 = vld [vmem:[%s318 + $0x20] sm:$0xff]
        %v402 = vld [vmem:[%s318 + $0x28] sm:$0xff]
        %v403 = vld [vmem:[%s318 + $0x30] sm:$0xff]
        %v404 = vld [vmem:[%s318 + $0x38] sm:$0xff]
        %v405 = vld [vmem:[%s318 + $0x40] sm:$0xff]
        %v406 = vld [vmem:[%s318 + $0x48] sm:$0xff]
        %v407 = vld [vmem:[%s318 + $0x50] sm:$0xff]
        %v408 = vld [vmem:[%s318 + $0x58] sm:$0xff]
        %v409 = vld [vmem:[%s318 + $0x60] sm:$0xff]
        %v410 = vld [vmem:[%s318 + $0x68] sm:$0xff]
        %v411 = vld [vmem:[%s318 + $0x70] sm:$0xff]
        %v412 = vld [vmem:[%s318 + $0x78] sm:$0xff]
        %v413 = vld [vmem:[%s326] sm:$0x1]
        %v415 = vlaneseq
        %v416 = vshrl.u32 %v415, 7
        %v417 = vsub.s32 0, %v416
        %v418 = vrot.slane %v413, %v417
        %420 = vmatprep.subr.mxu0 0.0
        %421 = vmatpush1.msra.mxu0 %v397
        %422 = vmatprep.subr.mxu0 0.0
        %423 = vmatpush1.msra.mxu0 %v398
        %424 = vmatprep.subr.mxu0 0.0
        %425 = vmatpush1.msra.mxu0 %v399
        %426 = vmatprep.subr.mxu0 0.0
        %427 = vmatpush1.msra.mxu0 %v400
        %428 = vmatprep.subr.mxu0 0.0
        %429 = vmatpush1.msra.mxu0 %v401
        %430 = vmatprep.subr.mxu0 0.0
        %431 = vmatpush1.msra.mxu0 %v402
        %432 = vmatprep.subr.mxu0 0.0
        %433 = vmatpush1.msra.mxu0 %v403
        %434 = vmatprep.subr.mxu0 0.0
        %435 = vmatpush1.msra.mxu0 %v404
        %436 = vmatprep.subr.mxu0 0.0
        %437 = vmatpush1.msra.mxu0 %v405
        %438 = vmatprep.subr.mxu0 0.0
        %439 = vmatpush1.msra.mxu0 %v406
        %440 = vmatprep.subr.mxu0 0.0
        %441 = vmatpush1.msra.mxu0 %v407
        %442 = vmatprep.subr.mxu0 0.0
        %443 = vmatpush1.msra.mxu0 %v408
        %444 = vmatprep.subr.mxu0 0.0
        %445 = vmatpush1.msra.mxu0 %v409
        %446 = vmatprep.subr.mxu0 0.0
        %447 = vmatpush1.msra.mxu0 %v410
        %448 = vmatprep.subr.mxu0 0.0
        %449 = vmatpush1.msra.mxu0 %v411
        %450 = vmatprep.subr.mxu0 0.0
        %451 = vmatpush1.msra.mxu0 %v412
        %452 = vmatprep.subr.mxu0 0.0
        %453 = vmatpush1.msra.mxu0 0.0
        %454 = vmatprep.subr.mxu0 0.0
        %455 = vmatpush1.msra.mxu0 0.0
        %456 = vmatprep.subr.mxu0 0.0
        %457 = vmatpush1.msra.mxu0 0.0
        %458 = vmatprep.subr.mxu0 0.0
        %459 = vmatpush1.msra.mxu0 0.0
        %460 = vmatprep.subr.mxu0 0.0
        %461 = vmatpush1.msra.mxu0 0.0
        %462 = vmatprep.subr.mxu0 0.0
        %463 = vmatpush1.msra.mxu0 0.0
        %464 = vmatprep.subr.mxu0 0.0
        %465 = vmatpush1.msra.mxu0 0.0
        %466 = vmatprep.subr.mxu0 0.0
        %467 = vmatpush1.msra.mxu0 0.0
        %468 = vmatprep.subr.mxu0 0.0
        %469 = vmatpush1.msra.mxu0 0.0
        %470 = vmatprep.subr.mxu0 0.0
        %471 = vmatpush1.msra.mxu0 0.0
        %472 = vmatprep.subr.mxu0 0.0
        %473 = vmatpush1.msra.mxu0 0.0
        %474 = vmatprep.subr.mxu0 0.0
        %475 = vmatpush1.msra.mxu0 0.0
        %476 = vmatprep.subr.mxu0 0.0
        %477 = vmatpush1.msra.mxu0 0.0
        %478 = vmatprep.subr.mxu0 0.0
        %479 = vmatpush1.msra.mxu0 0.0
        %480 = vmatprep.subr.mxu0 0.0
        %481 = vmatpush1.msra.mxu0 0.0
        %482 = vmatprep.subr.mxu0 0.0
        %483 = vmatpush1.msra.mxu0 0.0
        %484 = vmatprep.mubr.f32.mxu0 0.0
        %485 = vmatmul.mubr.f32.gmra.mrb[0].mxu0 %v396
        %v486 = vpop.f32.mrb[0].mxu0
        %v487 = vadd.f32 %v418, %v486
        %v488 = vpop.f32.mrb[0].mxu0
        %489 = vdwg.mxu0
        %490 = vst [vmem:[%s361] sm:$0xff] %v487
        %s491 = sand.u32 %s179, 1
        %s492 = scalar_lea.sflag [#allocation5], %s491
        %s493 = sand.u32 %s179, 1
        %s494 = smul.addr %s493, 8
        %s495 = scalar_lea.vmem [#allocation12], %s494
        // Predicated region
        $region65: #{tpu_custom_call.1} parent=39 // pred_check
          %p496 = pneg %p189
        $region66: #{tpu_custom_call.1} parent=39 // pred_check_branch
          %498 = sbr.rel (%p496) target = $region68
        $region67: #{tpu_custom_call.1} parent=39 // pred_region
          %s500 = ssub.s32 128, 128
          %501 = vsyncadd %s492, %s500
          %s502 = smul.addr %s32, 3
          %s503 = sadd.s32 %s33, %s502
          %s504 = smul.addr %s31, 6
          %s505 = sadd.s32 %s503, %s504
          %s506 = smul.addr %s505, 128
          %s507 = scalar_lea.hbm %s5, %s506
          %s509 = sshll.u32 %s495, 4
          %s510 = int_to_ptr.vmem [resolvable:$true] %s509
          %512 = dma.vmem_to_hbm [thread:$0]  %s510, 128, %s507, %s492
        $region68: #{tpu_custom_call.1} parent=39 // pred_fallthru
          _
      $region40: #{tpu_custom_call.1} parent=5 // pred_fallthru
        _
      %p513 = scmp.le.s32.totalorder 2, %s21
      // Predicated region
      $region69: #{tpu_custom_call.1} parent=5 // pred_check
        %p514 = pneg %p513
      $region70: #{tpu_custom_call.1} parent=5 // pred_check_branch
        %516 = sbr.rel (%p514) target = $region72
      $region71: #{tpu_custom_call.1} parent=5 // pred_region
        %s517 = ssub.s32 %s21, 2
        // Predicated region
        $region73: #{tpu_custom_call.1} parent=71 // pred_check
          %p518 = pneg %p195
        $region74: #{tpu_custom_call.1} parent=71 // pred_check_branch
          %520 = sbr.rel (%p518) target = $region76
        $region75: #{tpu_custom_call.1} parent=71 // pred_region
          %s521 = sand.u32 %s180, 1
          %s522 = scalar_lea.sflag [#allocation5], %s521
          %s523 = sand.u32 %s180, 1
          %s524 = smul.addr %s523, 8
          %s525 = scalar_lea.vmem [#allocation12], %s524
          %526 = dma.done %s522, 128
        $region76: #{tpu_custom_call.1} parent=71 // pred_fallthru
          _
      $region72: #{tpu_custom_call.1} parent=5 // pred_fallthru
        _
    $region6: #{tpu_custom_call.1} parent=1 // loop_footer
      %s25 = sadd.s32 1, %s21
    $region7: #{tpu_custom_call.1} parent=1 // loop_footer_branch
      %20 = sbr.rel target = $region3
    $region8: #{tpu_custom_call.1} parent=1 // loop_exit
      _
    %527 = vsyncpa [#allocation4], 1
    %s528 = scalar_lea.sflag [#allocation4], 1
    %529 = vsyncpa %s528, 1
    %530 = vsyncpa [#allocation7], 1
    %531 = vsyncpa [#allocation10], 1
    %s532 = scalar_lea.sflag [#allocation10], 1
    %533 = vsyncpa %s532, 1
    %534 = vsyncpa [#allocation5], 1
    %s535 = scalar_lea.sflag [#allocation5], 1
    %536 = vsyncpa %s535, 1

</llo_original>
